<compile_context>
chip_gen: v7x
topology: tpu7x:2x2x1
jax: 0.10.0
libtpu: 0.0.40
codegen_flags: <defaults>
</compile_context>

<pallas_src>
import jax
import jax.numpy as jnp
from jax.experimental import pallas as pl
from jax.experimental.pallas import tpu as pltpu

HIDDEN = 100          # true hidden dim of the module
PAD = 128             # lane-padded feature dim
N_LAYERS = 5          # module default
MAX_TB = 512          # max batch-tile rows per grid step


def _round_up(x, m):
    return ((x + m - 1) // m) * m


def _xavier_uniform(key, fan_in, fan_out):
    bound = jnp.sqrt(6.0 / (fan_in + fan_out))
    return jax.random.uniform(key, (fan_in, fan_out), jnp.float32, -bound, bound)


def _linear_bias(key, fan_in, fan_out):
    # PyTorch Linear default bias init: U(-1/sqrt(fan_in), 1/sqrt(fan_in))
    bound = 1.0 / jnp.sqrt(jnp.float32(fan_in))
    return jax.random.uniform(key, (fan_out,), jnp.float32, -bound, bound)


def make_params(key):
    """Deterministic parameters matching GlycemicModel.__init__ shapes.

    Weights are stored as [in_features, out_features] so the kernel computes
    x @ W + b directly (transpose of PyTorch's [out, in]).
    """
    dims = [1] + [HIDDEN] * (N_LAYERS - 1) + [3]   # 1 -> 100 -> 100 -> 100 -> 100 -> 3
    params = []
    for i in range(N_LAYERS):
        key, kw, kb = jax.random.split(key, 3)
        W = _xavier_uniform(kw, dims[i], dims[i + 1])
        b = _linear_bias(kb, dims[i], dims[i + 1])
        params.append((W, b))
    return params


def prepare_params(params):
    """Pad to TPU-friendly shapes. Layer-1 weight becomes a [1, PAD] row."""
    W1, b1 = params[0]
    w1_row = jnp.zeros((1, PAD), jnp.float32).at[0, : W1.shape[1]].set(W1[0])
    b1_row = jnp.zeros((1, PAD), jnp.float32).at[0, : b1.shape[0]].set(b1)
    padded = [w1_row, b1_row]
    for W, b in params[1:]:
        Wp = jnp.zeros((PAD, PAD), jnp.float32).at[: W.shape[0], : W.shape[1]].set(W)
        bp = jnp.zeros((1, PAD), jnp.float32).at[0, : b.shape[0]].set(b)
        padded.extend([Wp, bp])
    return tuple(padded)


def glycemic_kernel(t_ref,
                    w1_ref, b1_ref,
                    w2_ref, b2_ref,
                    w3_ref, b3_ref,
                    w4_ref, b4_ref,
                    w5_ref, b5_ref,
                    out_ref):
    """One batch tile of the MLP; all parameters VMEM-resident."""
    t = t_ref[...]                                                 # [TB, 1]
    # layer 1: in_features == 1 -> VPU outer product, no MXU pass
    h = jnp.tanh(t * w1_ref[...] + b1_ref[...])                    # [TB, PAD]
    # hidden layers 2..4: MXU matmul + bias + tanh (EUP)
    h = jnp.tanh(jnp.dot(h, w2_ref[...], preferred_element_type=jnp.float32) + b2_ref[...])
    h = jnp.tanh(jnp.dot(h, w3_ref[...], preferred_element_type=jnp.float32) + b3_ref[...])
    h = jnp.tanh(jnp.dot(h, w4_ref[...], preferred_element_type=jnp.float32) + b4_ref[...])
    # output layer: Linear, no activation
    out_ref[...] = jnp.dot(h, w5_ref[...], preferred_element_type=jnp.float32) + b5_ref[...]


@jax.jit
def glycemic_forward(t, padded_params):
    """t: [B, 1] float32 -> [B, 3] float32 (matches GlycemicModel.forward)."""
    B = t.shape[0]
    TB = min(MAX_TB, _round_up(B, 8))
    B_pad = _round_up(B, TB)
    t_p = jnp.pad(t.astype(jnp.float32), ((0, B_pad - B), (0, 0)))
    n_steps = B_pad // TB

    def const_spec(shape):
        # constant block index -> parameters stay VMEM-resident across tiles
        return pl.BlockSpec(shape, lambda i: (0, 0))

    in_specs = [pl.BlockSpec((TB, 1), lambda i: (i, 0))]           # t tile
    in_specs += [const_spec((1, PAD)), const_spec((1, PAD))]       # w1_row, b1
    for _ in range(3):
        in_specs += [const_spec((PAD, PAD)), const_spec((1, PAD))]  # w2..w4, b2..b4
    in_specs += [const_spec((PAD, PAD)), const_spec((1, PAD))]     # w5, b5

    param_bytes = sum(int(p.size) * 4 for p in padded_params)
    cost = pl.CostEstimate(
        flops=2 * B_pad * PAD * PAD * 4 + 2 * B_pad * PAD,
        transcendentals=4 * B_pad * PAD,
        bytes_accessed=param_bytes + B_pad * 1 * 4 + B_pad * PAD * 4,
    )

    out_pad = pl.pallas_call(
        glycemic_kernel,
        out_shape=jax.ShapeDtypeStruct((B_pad, PAD), jnp.float32),
        grid=(n_steps,),
        in_specs=in_specs,
        out_specs=pl.BlockSpec((TB, PAD), lambda i: (i, 0)),
        compiler_params=pltpu.CompilerParams(
            dimension_semantics=("parallel",)),
        cost_estimate=cost,
    )(t_p, *padded_params)

    # NOTE: at very large B the [B,128] writeback dominates HBM traffic; a
    # narrower output slab would trim it ~16x at the cost of masked stores.
    # At the module's default B=64 the lane-dense store is the right call.
    return out_pad[:B, :3]


def reference_forward(t, params):
    """Pure-JAX reference matching the PyTorch forward semantics."""
    x = t
    for i, (W, b) in enumerate(params):
        x = x @ W + b
        if i < len(params) - 1:
            x = jnp.tanh(x)
    return x


if __name__ == "__main__":
    key = jax.random.PRNGKey(0)
    kparams, kinput = jax.random.split(key)

    params = make_params(kparams)
    padded = prepare_params(params)

    B = 64  # module default batch_size
    t = jax.random.uniform(kinput, (B, 1), jnp.float32, 0.0, 10.0)

    out = glycemic_forward(t, padded)
    out = jax.block_until_ready(out)

    ref = reference_forward(t, params)
    assert out.shape == (B, 3), out.shape
    err = jnp.max(jnp.abs(out - ref))
    assert jnp.allclose(out, ref, atol=1e-4, rtol=1e-4), f"max abs err {err}"

    # TODO(synk): eq_1/eq_2/eq_3 need d(output)/dt (physics residuals);
    # pl.pallas_call has no autodiff rule by default, so the PINN gradient
    # path needs a custom_vjp or a pure-JAX twin of this forward.

    print("KERNEL_OK")
</pallas_src>

<mosaic_0001>
module attributes {stable_mosaic.version = 11 : i64} {
  func.func @glycemic_kernel(%arg0: i32, %arg1: memref<64x1xf32, #tpu.memory_space<vmem>>, %arg2: memref<1x128xf32, #tpu.memory_space<vmem>>, %arg3: memref<1x128xf32, #tpu.memory_space<vmem>>, %arg4: memref<128x128xf32, #tpu.memory_space<vmem>>, %arg5: memref<1x128xf32, #tpu.memory_space<vmem>>, %arg6: memref<128x128xf32, #tpu.memory_space<vmem>>, %arg7: memref<1x128xf32, #tpu.memory_space<vmem>>, %arg8: memref<128x128xf32, #tpu.memory_space<vmem>>, %arg9: memref<1x128xf32, #tpu.memory_space<vmem>>, %arg10: memref<128x128xf32, #tpu.memory_space<vmem>>, %arg11: memref<1x128xf32, #tpu.memory_space<vmem>>, %arg12: memref<64x128xf32, #tpu.memory_space<vmem>>) attributes {dimension_semantics = [#tpu.dimension_semantics<parallel>], iteration_bounds = array<i64: 1>, scalar_prefetch = 0 : i64, scratch_operands = 0 : i64, tpu.core_type = #tpu.core_type<tc>, window_params = [{transform_indices = @transform_0, window_bounds = array<i64: 64, 1>}, {pipeline_mode = #tpu.pipeline_mode<synchronous>, transform_indices = @transform_1, window_bounds = array<i64: 1, 128>}, {pipeline_mode = #tpu.pipeline_mode<synchronous>, transform_indices = @transform_2, window_bounds = array<i64: 1, 128>}, {pipeline_mode = #tpu.pipeline_mode<synchronous>, transform_indices = @transform_3, window_bounds = array<i64: 128, 128>}, {pipeline_mode = #tpu.pipeline_mode<synchronous>, transform_indices = @transform_4, window_bounds = array<i64: 1, 128>}, {pipeline_mode = #tpu.pipeline_mode<synchronous>, transform_indices = @transform_5, window_bounds = array<i64: 128, 128>}, {pipeline_mode = #tpu.pipeline_mode<synchronous>, transform_indices = @transform_6, window_bounds = array<i64: 1, 128>}, {pipeline_mode = #tpu.pipeline_mode<synchronous>, transform_indices = @transform_7, window_bounds = array<i64: 128, 128>}, {pipeline_mode = #tpu.pipeline_mode<synchronous>, transform_indices = @transform_8, window_bounds = array<i64: 1, 128>}, {pipeline_mode = #tpu.pipeline_mode<synchronous>, transform_indices = @transform_9, window_bounds = array<i64: 128, 128>}, {pipeline_mode = #tpu.pipeline_mode<synchronous>, transform_indices = @transform_10, window_bounds = array<i64: 1, 128>}, {transform_indices = @transform_11, window_bounds = array<i64: 64, 128>}]} {
    %c0 = arith.constant 0 : index
    %c0_0 = arith.constant 0 : index
    %0 = vector.load %arg1[%c0, %c0_0] : memref<64x1xf32, #tpu.memory_space<vmem>>, vector<64x1xf32>
    %c0_1 = arith.constant 0 : index
    %c0_2 = arith.constant 0 : index
    %1 = vector.load %arg2[%c0_1, %c0_2] : memref<1x128xf32, #tpu.memory_space<vmem>>, vector<1x128xf32>
    %2 = vector.broadcast %0 : vector<64x1xf32> to vector<64x128xf32>
    %3 = vector.broadcast %1 : vector<1x128xf32> to vector<64x128xf32>
    %4 = arith.mulf %2, %3 : vector<64x128xf32>
    %c0_3 = arith.constant 0 : index
    %c0_4 = arith.constant 0 : index
    %5 = vector.load %arg3[%c0_3, %c0_4] : memref<1x128xf32, #tpu.memory_space<vmem>>, vector<1x128xf32>
    %6 = vector.broadcast %5 : vector<1x128xf32> to vector<64x128xf32>
    %7 = arith.addf %4, %6 : vector<64x128xf32>
    %8 = math.tanh %7 : vector<64x128xf32>
    %c0_5 = arith.constant 0 : index
    %c0_6 = arith.constant 0 : index
    %9 = vector.load %arg4[%c0_5, %c0_6] : memref<128x128xf32, #tpu.memory_space<vmem>>, vector<128x128xf32>
    %cst = arith.constant dense<0.000000e+00> : vector<64x128xf32>
    %10 = tpu.matmul %8, %9, %cst {dimension_numbers = #tpu.dot_dimension_numbers<[1], [0], [0], [1], [0, 0, 1, 1], [], []>} : vector<64x128xf32>, vector<128x128xf32>, vector<64x128xf32> -> vector<64x128xf32>
    %c0_7 = arith.constant 0 : index
    %c0_8 = arith.constant 0 : index
    %11 = vector.load %arg5[%c0_7, %c0_8] : memref<1x128xf32, #tpu.memory_space<vmem>>, vector<1x128xf32>
    %12 = vector.broadcast %11 : vector<1x128xf32> to vector<64x128xf32>
    %13 = arith.addf %10, %12 : vector<64x128xf32>
    %14 = math.tanh %13 : vector<64x128xf32>
    %c0_9 = arith.constant 0 : index
    %c0_10 = arith.constant 0 : index
    %15 = vector.load %arg6[%c0_9, %c0_10] : memref<128x128xf32, #tpu.memory_space<vmem>>, vector<128x128xf32>
    %cst_11 = arith.constant dense<0.000000e+00> : vector<64x128xf32>
    %16 = tpu.matmul %14, %15, %cst_11 {dimension_numbers = #tpu.dot_dimension_numbers<[1], [0], [0], [1], [0, 0, 1, 1], [], []>} : vector<64x128xf32>, vector<128x128xf32>, vector<64x128xf32> -> vector<64x128xf32>
    %c0_12 = arith.constant 0 : index
    %c0_13 = arith.constant 0 : index
    %17 = vector.load %arg7[%c0_12, %c0_13] : memref<1x128xf32, #tpu.memory_space<vmem>>, vector<1x128xf32>
    %18 = vector.broadcast %17 : vector<1x128xf32> to vector<64x128xf32>
    %19 = arith.addf %16, %18 : vector<64x128xf32>
    %20 = math.tanh %19 : vector<64x128xf32>
    %c0_14 = arith.constant 0 : index
    %c0_15 = arith.constant 0 : index
    %21 = vector.load %arg8[%c0_14, %c0_15] : memref<128x128xf32, #tpu.memory_space<vmem>>, vector<128x128xf32>
    %cst_16 = arith.constant dense<0.000000e+00> : vector<64x128xf32>
    %22 = tpu.matmul %20, %21, %cst_16 {dimension_numbers = #tpu.dot_dimension_numbers<[1], [0], [0], [1], [0, 0, 1, 1], [], []>} : vector<64x128xf32>, vector<128x128xf32>, vector<64x128xf32> -> vector<64x128xf32>
    %c0_17 = arith.constant 0 : index
    %c0_18 = arith.constant 0 : index
    %23 = vector.load %arg9[%c0_17, %c0_18] : memref<1x128xf32, #tpu.memory_space<vmem>>, vector<1x128xf32>
    %24 = vector.broadcast %23 : vector<1x128xf32> to vector<64x128xf32>
    %25 = arith.addf %22, %24 : vector<64x128xf32>
    %26 = math.tanh %25 : vector<64x128xf32>
    %c0_19 = arith.constant 0 : index
    %c0_20 = arith.constant 0 : index
    %27 = vector.load %arg10[%c0_19, %c0_20] : memref<128x128xf32, #tpu.memory_space<vmem>>, vector<128x128xf32>
    %cst_21 = arith.constant dense<0.000000e+00> : vector<64x128xf32>
    %28 = tpu.matmul %26, %27, %cst_21 {dimension_numbers = #tpu.dot_dimension_numbers<[1], [0], [0], [1], [0, 0, 1, 1], [], []>} : vector<64x128xf32>, vector<128x128xf32>, vector<64x128xf32> -> vector<64x128xf32>
    %c0_22 = arith.constant 0 : index
    %c0_23 = arith.constant 0 : index
    %29 = vector.load %arg11[%c0_22, %c0_23] : memref<1x128xf32, #tpu.memory_space<vmem>>, vector<1x128xf32>
    %30 = vector.broadcast %29 : vector<1x128xf32> to vector<64x128xf32>
    %31 = arith.addf %28, %30 : vector<64x128xf32>
    %c0_24 = arith.constant 0 : index
    %c0_25 = arith.constant 0 : index
    %32 = vector.load %arg12[%c0_24, %c0_25] : memref<64x128xf32, #tpu.memory_space<vmem>>, vector<64x128xf32>
    tpu.vector_store %arg12[%c0_24, %c0_25], %31 {strides = array<i32>} : memref<64x128xf32, #tpu.memory_space<vmem>>, vector<64x128xf32>,
    return
  }
  func.func @transform_0(%arg0: i32) -> (i32, i32) {
    %c0_i32 = arith.constant 0 : i32
    %c0_i32_0 = arith.constant 0 : i32
    return %arg0, %c0_i32 : i32, i32
  }
  func.func @transform_1(%arg0: i32) -> (i32, i32) {
    %c0_i32 = arith.constant 0 : i32
    %c0_i32_0 = arith.constant 0 : i32
    %c0_i32_1 = arith.constant 0 : i32
    return %c0_i32, %c0_i32_0 : i32, i32
  }
  func.func @transform_2(%arg0: i32) -> (i32, i32) {
    %c0_i32 = arith.constant 0 : i32
    %c0_i32_0 = arith.constant 0 : i32
    %c0_i32_1 = arith.constant 0 : i32
    return %c0_i32, %c0_i32_0 : i32, i32
  }
  func.func @transform_3(%arg0: i32) -> (i32, i32) {
    %c0_i32 = arith.constant 0 : i32
    %c0_i32_0 = arith.constant 0 : i32
    %c0_i32_1 = arith.constant 0 : i32
    return %c0_i32, %c0_i32_0 : i32, i32
  }
  func.func @transform_4(%arg0: i32) -> (i32, i32) {
    %c0_i32 = arith.constant 0 : i32
    %c0_i32_0 = arith.constant 0 : i32
    %c0_i32_1 = arith.constant 0 : i32
    return %c0_i32, %c0_i32_0 : i32, i32
  }
  func.func @transform_5(%arg0: i32) -> (i32, i32) {
    %c0_i32 = arith.constant 0 : i32
    %c0_i32_0 = arith.constant 0 : i32
    %c0_i32_1 = arith.constant 0 : i32
    return %c0_i32, %c0_i32_0 : i32, i32
  }
  func.func @transform_6(%arg0: i32) -> (i32, i32) {
    %c0_i32 = arith.constant 0 : i32
    %c0_i32_0 = arith.constant 0 : i32
    %c0_i32_1 = arith.constant 0 : i32
    return %c0_i32, %c0_i32_0 : i32, i32
  }
  func.func @transform_7(%arg0: i32) -> (i32, i32) {
    %c0_i32 = arith.constant 0 : i32
    %c0_i32_0 = arith.constant 0 : i32
    %c0_i32_1 = arith.constant 0 : i32
    return %c0_i32, %c0_i32_0 : i32, i32
  }
  func.func @transform_8(%arg0: i32) -> (i32, i32) {
    %c0_i32 = arith.constant 0 : i32
    %c0_i32_0 = arith.constant 0 : i32
    %c0_i32_1 = arith.constant 0 : i32
    return %c0_i32, %c0_i32_0 : i32, i32
  }
  func.func @transform_9(%arg0: i32) -> (i32, i32) {
    %c0_i32 = arith.constant 0 : i32
    %c0_i32_0 = arith.constant 0 : i32
    %c0_i32_1 = arith.constant 0 : i32
    return %c0_i32, %c0_i32_0 : i32, i32
  }
  func.func @transform_10(%arg0: i32) -> (i32, i32) {
    %c0_i32 = arith.constant 0 : i32
    %c0_i32_0 = arith.constant 0 : i32
    %c0_i32_1 = arith.constant 0 : i32
    return %c0_i32, %c0_i32_0 : i32, i32
  }
  func.func @transform_11(%arg0: i32) -> (i32, i32) {
    %c0_i32 = arith.constant 0 : i32
    %c0_i32_0 = arith.constant 0 : i32
    return %arg0, %c0_i32 : i32, i32
  }
}

</mosaic_0001>

<llo_original>
// kernel: glycemic_forward.1
$region0: #{glycemic_forward.1}
  #allocation0 [shape = 'u32[]', space=smem, size = 0x4, offset = 0x4, fixed_abs, tag = 'smem constant byte address 0x4 - core index']
  #allocation1 [shape = 'u32[144,128]{1,0:T(1,128)}', space=vmem, size = 0x12000, scoped, tag = 'internal scratch']
  %s0 = inlined_call_operand.vmem [shape: f32[64,1], index: 0, kind: input, shape index: {}]
  %s1 = inlined_call_operand.vmem [shape: f32[1,128], index: 1, kind: input, shape index: {}]
  %s2 = inlined_call_operand.vmem [shape: f32[1,128], index: 2, kind: input, shape index: {}]
  %s3 = inlined_call_operand.hbm [shape: f32[128,128], index: 3, kind: input, shape index: {}]
  %s4 = inlined_call_operand.vmem [shape: f32[1,128], index: 4, kind: input, shape index: {}]
  %s5 = inlined_call_operand.hbm [shape: f32[128,128], index: 5, kind: input, shape index: {}]
  %s6 = inlined_call_operand.vmem [shape: f32[1,128], index: 6, kind: input, shape index: {}]
  %s7 = inlined_call_operand.hbm [shape: f32[128,128], index: 7, kind: input, shape index: {}]
  %s8 = inlined_call_operand.vmem [shape: f32[1,128], index: 8, kind: input, shape index: {}]
  %s9 = inlined_call_operand.hbm [shape: f32[128,128], index: 9, kind: input, shape index: {}]
  %s10 = inlined_call_operand.vmem [shape: f32[1,128], index: 10, kind: input, shape index: {}]
  %s11 = inlined_call_operand.vmem [shape: f32[64,128], index: 11, kind: output, shape index: {}]
  %s12 = sld [smem:[#allocation0]]
  $region70: #{glycemic_forward.1} parent=0
    _
  %s14 = ssub.s32 1, %s12
  %s15 = scalar_select 0, %s14, %s12
  $region1: #{glycemic_forward.1} parent=0
    #allocation2 [shape = 'u8[65536]{0}', space=vmem, size = 0x10000, scoped, tag = 'input window, operand 3, single buffered']
    #allocation3 [shape = 's32[1]{0}', space=sflag, size = 0x4, scoped, tag = 'scoped memory for glycemic_forward.1']
    #allocation4 [shape = 'u8[65536]{0}', space=vmem, size = 0x10000, scoped, tag = 'input window, operand 5, single buffered']
    #allocation5 [shape = 's32[1]{0}', space=sflag, size = 0x4, scoped, tag = 'scoped memory for glycemic_forward.1']
    #allocation6 [shape = 'u8[65536]{0}', space=vmem, size = 0x10000, scoped, tag = 'input window, operand 7, single buffered']
    #allocation7 [shape = 'u8[65536]{0}', space=vmem, size = 0x10000, scoped, tag = 'input window, operand 9, single buffered']
    #allocation8 [shape = 's32[1]{0}', space=sflag, size = 0x4, scoped, tag = 'scoped memory for glycemic_forward.1']
    %16 = vsyncpa [#allocation3], 0
    %17 = vsyncpa [#allocation5], 0
    %18 = vsyncpa [#allocation8], 0
    // Predicated region
    $region2: #{glycemic_forward.1} parent=1 // pred_check
      _
    $region3: #{glycemic_forward.1} parent=1 // pred_check_branch
      %20 = sbr.rel (0) target = $region5
    $region4: #{glycemic_forward.1} parent=1 // pred_region
      _
    $region5: #{glycemic_forward.1} parent=1 // pred_fallthru
      _
    // Predicated region
    $region6: #{glycemic_forward.1} parent=1 // pred_check
      _
    $region7: #{glycemic_forward.1} parent=1 // pred_check_branch
      %22 = sbr.rel (0) target = $region9
    $region8: #{glycemic_forward.1} parent=1 // pred_region
      _
    $region9: #{glycemic_forward.1} parent=1 // pred_fallthru
      _
    // Predicated region
    $region10: #{glycemic_forward.1} parent=1 // pred_check
      _
    $region11: #{glycemic_forward.1} parent=1 // pred_check_branch
      %24 = sbr.rel (0) target = $region13
    $region12: #{glycemic_forward.1} parent=1 // pred_region
      _
    $region13: #{glycemic_forward.1} parent=1 // pred_fallthru
      _
    // Predicated region
    $region14: #{glycemic_forward.1} parent=1 // pred_check
      _
    $region15: #{glycemic_forward.1} parent=1 // pred_check_branch
      %26 = sbr.rel (0) target = $region17
    $region16: #{glycemic_forward.1} parent=1 // pred_region
      %s28 = ssub.s32 2048, 2048
      %29 = vsyncadd [#allocation3], %s28
      %s30 = sshll.u32 [#allocation2], 4
      %s31 = int_to_ptr.vmem [resolvable:$true] %s30
      %36 = dma.hbm_to_vmem [thread:$0]  %s3, 2048, %s31, [#allocation3], 128, 128, 8
    $region17: #{glycemic_forward.1} parent=1 // pred_fallthru
      _
    // Predicated region
    $region18: #{glycemic_forward.1} parent=1 // pred_check
      _
    $region19: #{glycemic_forward.1} parent=1 // pred_check_branch
      %38 = sbr.rel (0) target = $region21
    $region20: #{glycemic_forward.1} parent=1 // pred_region
      _
    $region21: #{glycemic_forward.1} parent=1 // pred_fallthru
      _
    // Predicated region
    $region22: #{glycemic_forward.1} parent=1 // pred_check
      _
    $region23: #{glycemic_forward.1} parent=1 // pred_check_branch
      %40 = sbr.rel (0) target = $region25
    $region24: #{glycemic_forward.1} parent=1 // pred_region
      %s42 = ssub.s32 2048, 2048
      %43 = vsyncadd [#allocation5], %s42
      %s44 = sshll.u32 [#allocation4], 4
      %s45 = int_to_ptr.vmem [resolvable:$true] %s44
      %50 = dma.hbm_to_vmem [thread:$0]  %s5, 2048, %s45, [#allocation5], 128, 128, 8
    $region25: #{glycemic_forward.1} parent=1 // pred_fallthru
      _
    // Predicated region
    $region26: #{glycemic_forward.1} parent=1 // pred_check
      _
    $region27: #{glycemic_forward.1} parent=1 // pred_check_branch
      %52 = sbr.rel (0) target = $region29
    $region28: #{glycemic_forward.1} parent=1 // pred_region
      _
    $region29: #{glycemic_forward.1} parent=1 // pred_fallthru
      _
    // Predicated region
    $region30: #{glycemic_forward.1} parent=1 // pred_check
      _
    $region31: #{glycemic_forward.1} parent=1 // pred_check_branch
      %54 = sbr.rel (0) target = $region33
    $region32: #{glycemic_forward.1} parent=1 // pred_region
      %s56 = ssub.s32 2048, 2048
      %57 = vsyncadd [#allocation5], %s56
      %s58 = sshll.u32 [#allocation6], 4
      %s59 = int_to_ptr.vmem [resolvable:$true] %s58
      %64 = dma.hbm_to_vmem [thread:$0]  %s7, 2048, %s59, [#allocation5], 128, 128, 8
    $region33: #{glycemic_forward.1} parent=1 // pred_fallthru
      _
    // Predicated region
    $region34: #{glycemic_forward.1} parent=1 // pred_check
      _
    $region35: #{glycemic_forward.1} parent=1 // pred_check_branch
      %66 = sbr.rel (0) target = $region37
    $region36: #{glycemic_forward.1} parent=1 // pred_region
      _
    $region37: #{glycemic_forward.1} parent=1 // pred_fallthru
      _
    // Predicated region
    $region38: #{glycemic_forward.1} parent=1 // pred_check
      _
    $region39: #{glycemic_forward.1} parent=1 // pred_check_branch
      %68 = sbr.rel (0) target = $region41
    $region40: #{glycemic_forward.1} parent=1 // pred_region
      %s70 = ssub.s32 2048, 2048
      %71 = vsyncadd [#allocation8], %s70
      %s72 = sshll.u32 [#allocation7], 4
      %s73 = int_to_ptr.vmem [resolvable:$true] %s72
      %78 = dma.hbm_to_vmem [thread:$0]  %s9, 2048, %s73, [#allocation8], 128, 128, 8
    $region41: #{glycemic_forward.1} parent=1 // pred_fallthru
      _
    // Predicated region
    $region42: #{glycemic_forward.1} parent=1 // pred_check
      _
    $region43: #{glycemic_forward.1} parent=1 // pred_check_branch
      %80 = sbr.rel (0) target = $region45
    $region44: #{glycemic_forward.1} parent=1 // pred_region
      _
    $region45: #{glycemic_forward.1} parent=1 // pred_fallthru
      _
    // Predicated region
    $region46: #{glycemic_forward.1} parent=1 // pred_check
      _
    $region47: #{glycemic_forward.1} parent=1 // pred_check_branch
      %82 = sbr.rel (0) target = $region49
    $region48: #{glycemic_forward.1} parent=1 // pred_region
      %83 = dma.done [#allocation3], 2048
    $region49: #{glycemic_forward.1} parent=1 // pred_fallthru
      _
    // Predicated region
    $region50: #{glycemic_forward.1} parent=1 // pred_check
      _
    $region51: #{glycemic_forward.1} parent=1 // pred_check_branch
      %85 = sbr.rel (0) target = $region53
    $region52: #{glycemic_forward.1} parent=1 // pred_region
      %86 = dma.done [#allocation5], 2048
    $region53: #{glycemic_forward.1} parent=1 // pred_fallthru
      _
    // Predicated region
    $region54: #{glycemic_forward.1} parent=1 // pred_check
      _
    $region55: #{glycemic_forward.1} parent=1 // pred_check_branch
      %88 = sbr.rel (0) target = $region57
    $region56: #{glycemic_forward.1} parent=1 // pred_region
      %89 = dma.done [#allocation5], 2048
    $region57: #{glycemic_forward.1} parent=1 // pred_fallthru
      _
    // Predicated region
    $region58: #{glycemic_forward.1} parent=1 // pred_check
      _
    $region59: #{glycemic_forward.1} parent=1 // pred_check_branch
      %91 = sbr.rel (0) target = $region61
    $region60: #{glycemic_forward.1} parent=1 // pred_region
      %92 = dma.done [#allocation8], 2048
    $region61: #{glycemic_forward.1} parent=1 // pred_fallthru
      _
    %v93 = vld [vmem:[%s0] sm:$0xff]
    %v94 = vld [vmem:[%s0 + $0x8] sm:$0xff]
    %v95 = vld [vmem:[%s0 + $0x10] sm:$0xff]
    %v96 = vld [vmem:[%s0 + $0x18] sm:$0xff]
    %v97 = vld [vmem:[%s0 + $0x20] sm:$0xff]
    %v98 = vld [vmem:[%s0 + $0x28] sm:$0xff]
    %v99 = vld [vmem:[%s0 + $0x30] sm:$0xff]
    %v100 = vld [vmem:[%s0 + $0x38] sm:$0xff]
    %v101 = vld [vmem:[%s1] sm:$0x1]
    %103 = vset.pattern.permute.xlu0 0
    %104 = vperm.xlu0 %103, %v93
    %v105 = vpop.permute.xlu0 %104
    %108 = vset.pattern.permute.xlu0 0
    %109 = vperm.xlu0 %108, %v94
    %v110 = vpop.permute.xlu0 %109
    %113 = vset.pattern.permute.xlu0 0
    %114 = vperm.xlu0 %113, %v95
    %v115 = vpop.permute.xlu0 %114
    %118 = vset.pattern.permute.xlu0 0
    %119 = vperm.xlu0 %118, %v96
    %v120 = vpop.permute.xlu0 %119
    %123 = vset.pattern.permute.xlu0 0
    %124 = vperm.xlu0 %123, %v97
    %v125 = vpop.permute.xlu0 %124
    %128 = vset.pattern.permute.xlu0 0
    %129 = vperm.xlu0 %128, %v98
    %v130 = vpop.permute.xlu0 %129
    %133 = vset.pattern.permute.xlu0 0
    %134 = vperm.xlu0 %133, %v99
    %v135 = vpop.permute.xlu0 %134
    %138 = vset.pattern.permute.xlu0 0
    %139 = vperm.xlu0 %138, %v100
    %v140 = vpop.permute.xlu0 %139
    %v143 = vlaneseq
    %v144 = vshrl.u32 %v143, 7
    %v145 = vsub.s32 0, %v144
    %v146 = vrot.slane %v101, %v145
    %v148 = vmul.f32 %v105, %v146
    %v149 = vmul.f32 %v110, %v146
    %v150 = vmul.f32 %v115, %v146
    %v151 = vmul.f32 %v120, %v146
    %v152 = vmul.f32 %v125, %v146
    %v153 = vmul.f32 %v130, %v146
    %v154 = vmul.f32 %v135, %v146
    %v155 = vmul.f32 %v140, %v146
    %v156 = vld [vmem:[%s2] sm:$0x1]
    %v158 = vlaneseq
    %v159 = vshrl.u32 %v158, 7
    %v160 = vsub.s32 0, %v159
    %v161 = vrot.slane %v156, %v160
    %v163 = vadd.f32 %v148, %v161
    %v164 = vadd.f32 %v149, %v161
    %v165 = vadd.f32 %v150, %v161
    %v166 = vadd.f32 %v151, %v161
    %v167 = vadd.f32 %v152, %v161
    %v168 = vadd.f32 %v153, %v161
    %v169 = vadd.f32 %v154, %v161
    %v170 = vadd.f32 %v155, %v161
    %v171 = vtanh.pop %v163
    %v172 = vtanh.pop %v164
    %v173 = vtanh.pop %v165
    %v174 = vtanh.pop %v166
    %v175 = vtanh.pop %v167
    %v176 = vtanh.pop %v168
    %v177 = vtanh.pop %v169
    %v178 = vtanh.pop %v170
    %v179 = vld [vmem:[#allocation2] sm:$0xff]
    %v180 = vld [vmem:[#allocation2 + $0x8] sm:$0xff]
    %v181 = vld [vmem:[#allocation2 + $0x10] sm:$0xff]
    %v182 = vld [vmem:[#allocation2 + $0x18] sm:$0xff]
    %v183 = vld [vmem:[#allocation2 + $0x20] sm:$0xff]
    %v184 = vld [vmem:[#allocation2 + $0x28] sm:$0xff]
    %v185 = vld [vmem:[#allocation2 + $0x30] sm:$0xff]
    %v186 = vld [vmem:[#allocation2 + $0x38] sm:$0xff]
    %v187 = vld [vmem:[#allocation2 + $0x40] sm:$0xff]
    %v188 = vld [vmem:[#allocation2 + $0x48] sm:$0xff]
    %v189 = vld [vmem:[#allocation2 + $0x50] sm:$0xff]
    %v190 = vld [vmem:[#allocation2 + $0x58] sm:$0xff]
    %v191 = vld [vmem:[#allocation2 + $0x60] sm:$0xff]
    %v192 = vld [vmem:[#allocation2 + $0x68] sm:$0xff]
    %v193 = vld [vmem:[#allocation2 + $0x70] sm:$0xff]
    %v194 = vld [vmem:[#allocation2 + $0x78] sm:$0xff]
    %v195 = vld [vmem:[%s4] sm:$0x1]
    %v197 = vlaneseq
    %v198 = vshrl.u32 %v197, 7
    %v199 = vsub.s32 0, %v198
    %v200 = vrot.slane %v195, %v199
    %202 = vmatprep.subr.mxu0 0.0
    %203 = vmatpush1.msra.mxu0 %v179
    %204 = vmatprep.subr.mxu0 0.0
    %205 = vmatpush1.msra.mxu0 %v180
    %206 = vmatprep.subr.mxu0 0.0
    %207 = vmatpush1.msra.mxu0 %v181
    %208 = vmatprep.subr.mxu0 0.0
    %209 = vmatpush1.msra.mxu0 %v182
    %210 = vmatprep.subr.mxu0 0.0
    %211 = vmatpush1.msra.mxu0 %v183
    %212 = vmatprep.subr.mxu0 0.0
    %213 = vmatpush1.msra.mxu0 %v184
    %214 = vmatprep.subr.mxu0 0.0
    %215 = vmatpush1.msra.mxu0 %v185
    %216 = vmatprep.subr.mxu0 0.0
    %217 = vmatpush1.msra.mxu0 %v186
    %218 = vmatprep.subr.mxu0 0.0
    %219 = vmatpush1.msra.mxu0 %v187
    %220 = vmatprep.subr.mxu0 0.0
    %221 = vmatpush1.msra.mxu0 %v188
    %222 = vmatprep.subr.mxu0 0.0
    %223 = vmatpush1.msra.mxu0 %v189
    %224 = vmatprep.subr.mxu0 0.0
    %225 = vmatpush1.msra.mxu0 %v190
    %226 = vmatprep.subr.mxu0 0.0
    %227 = vmatpush1.msra.mxu0 %v191
    %228 = vmatprep.subr.mxu0 0.0
    %229 = vmatpush1.msra.mxu0 %v192
    %230 = vmatprep.subr.mxu0 0.0
    %231 = vmatpush1.msra.mxu0 %v193
    %232 = vmatprep.subr.mxu0 0.0
    %233 = vmatpush1.msra.mxu0 %v194
    %234 = vmatprep.subr.mxu0 0.0
    %235 = vmatpush1.msra.mxu0 0.0
    %236 = vmatprep.subr.mxu0 0.0
    %237 = vmatpush1.msra.mxu0 0.0
    %238 = vmatprep.subr.mxu0 0.0
    %239 = vmatpush1.msra.mxu0 0.0
    %240 = vmatprep.subr.mxu0 0.0
    %241 = vmatpush1.msra.mxu0 0.0
    %242 = vmatprep.subr.mxu0 0.0
    %243 = vmatpush1.msra.mxu0 0.0
    %244 = vmatprep.subr.mxu0 0.0
    %245 = vmatpush1.msra.mxu0 0.0
    %246 = vmatprep.subr.mxu0 0.0
    %247 = vmatpush1.msra.mxu0 0.0
    %248 = vmatprep.subr.mxu0 0.0
    %249 = vmatpush1.msra.mxu0 0.0
    %250 = vmatprep.subr.mxu0 0.0
    %251 = vmatpush1.msra.mxu0 0.0
    %252 = vmatprep.subr.mxu0 0.0
    %253 = vmatpush1.msra.mxu0 0.0
    %254 = vmatprep.subr.mxu0 0.0
    %255 = vmatpush1.msra.mxu0 0.0
    %256 = vmatprep.subr.mxu0 0.0
    %257 = vmatpush1.msra.mxu0 0.0
    %258 = vmatprep.subr.mxu0 0.0
    %259 = vmatpush1.msra.mxu0 0.0
    %260 = vmatprep.subr.mxu0 0.0
    %261 = vmatpush1.msra.mxu0 0.0
    %262 = vmatprep.subr.mxu0 0.0
    %263 = vmatpush1.msra.mxu0 0.0
    %264 = vmatprep.subr.mxu0 0.0
    %265 = vmatpush1.msra.mxu0 0.0
    %266 = vmatprep.mubr.f32.mxu0 0.0
    %267 = vmatmul.mubr.f32.gmra.mrb[0].mxu0 %v171
    %v268 = vpop.f32.mrb[0].mxu0
    %v269 = vadd.f32 %v200, %v268
    %v270 = vpop.f32.mrb[0].mxu0
    %271 = vmatprep.mubr.f32.mxu0 0.0
    %272 = vmatmul.mubr.f32.gmra.mrb[0].mxu0 %v172
    %v273 = vpop.f32.mrb[0].mxu0
    %v274 = vadd.f32 %v200, %v273
    %v275 = vpop.f32.mrb[0].mxu0
    %276 = vmatprep.mubr.f32.mxu0 0.0
    %277 = vmatmul.mubr.f32.gmra.mrb[0].mxu0 %v173
    %v278 = vpop.f32.mrb[0].mxu0
    %v279 = vadd.f32 %v200, %v278
    %v280 = vpop.f32.mrb[0].mxu0
    %281 = vmatprep.mubr.f32.mxu0 0.0
    %282 = vmatmul.mubr.f32.gmra.mrb[0].mxu0 %v174
    %v283 = vpop.f32.mrb[0].mxu0
    %v284 = vadd.f32 %v200, %v283
    %v285 = vpop.f32.mrb[0].mxu0
    %286 = vmatprep.mubr.f32.mxu0 0.0
    %287 = vmatmul.mubr.f32.gmra.mrb[0].mxu0 %v175
    %v288 = vpop.f32.mrb[0].mxu0
    %v289 = vadd.f32 %v200, %v288
    %v290 = vpop.f32.mrb[0].mxu0
    %291 = vmatprep.mubr.f32.mxu0 0.0
    %292 = vmatmul.mubr.f32.gmra.mrb[0].mxu0 %v176
    %v293 = vpop.f32.mrb[0].mxu0
    %v294 = vadd.f32 %v200, %v293
    %v295 = vpop.f32.mrb[0].mxu0
    %296 = vmatprep.mubr.f32.mxu0 0.0
    %297 = vmatmul.mubr.f32.gmra.mrb[0].mxu0 %v177
    %v298 = vpop.f32.mrb[0].mxu0
    %v299 = vadd.f32 %v200, %v298
    %v300 = vpop.f32.mrb[0].mxu0
    %301 = vmatprep.mubr.f32.mxu0 0.0
    %302 = vmatmul.mubr.f32.gmra.mrb[0].mxu0 %v178
    %v303 = vpop.f32.mrb[0].mxu0
    %v304 = vadd.f32 %v200, %v303
    %v305 = vpop.f32.mrb[0].mxu0
    %306 = vdwg.mxu0
    %v307 = vtanh.pop %v269
    %v308 = vtanh.pop %v274
    %v309 = vtanh.pop %v279
    %v310 = vtanh.pop %v284
    %v311 = vtanh.pop %v289
    %v312 = vtanh.pop %v294
    %v313 = vtanh.pop %v299
    %v314 = vtanh.pop %v304
    %v315 = vld [vmem:[#allocation4] sm:$0xff]
    %v316 = vld [vmem:[#allocation4 + $0x8] sm:$0xff]
    %v317 = vld [vmem:[#allocation4 + $0x10] sm:$0xff]
    %v318 = vld [vmem:[#allocation4 + $0x18] sm:$0xff]
    %v319 = vld [vmem:[#allocation4 + $0x20] sm:$0xff]
    %v320 = vld [vmem:[#allocation4 + $0x28] sm:$0xff]
    %v321 = vld [vmem:[#allocation4 + $0x30] sm:$0xff]
    %v322 = vld [vmem:[#allocation4 + $0x38] sm:$0xff]
    %v323 = vld [vmem:[#allocation4 + $0x40] sm:$0xff]
    %v324 = vld [vmem:[#allocation4 + $0x48] sm:$0xff]
    %v325 = vld [vmem:[#allocation4 + $0x50] sm:$0xff]
    %v326 = vld [vmem:[#allocation4 + $0x58] sm:$0xff]
    %v327 = vld [vmem:[#allocation4 + $0x60] sm:$0xff]
    %v328 = vld [vmem:[#allocation4 + $0x68] sm:$0xff]
    %v329 = vld [vmem:[#allocation4 + $0x70] sm:$0xff]
    %v330 = vld [vmem:[#allocation4 + $0x78] sm:$0xff]
    %v331 = vld [vmem:[%s6] sm:$0x1]
    %v333 = vlaneseq
    %v334 = vshrl.u32 %v333, 7
    %v335 = vsub.s32 0, %v334
    %v336 = vrot.slane %v331, %v335
    %338 = vmatprep.subr.mxu0 0.0
    %339 = vmatpush1.msra.mxu0 %v315
    %340 = vmatprep.subr.mxu0 0.0
    %341 = vmatpush1.msra.mxu0 %v316
    %342 = vmatprep.subr.mxu0 0.0
    %343 = vmatpush1.msra.mxu0 %v317
    %344 = vmatprep.subr.mxu0 0.0
    %345 = vmatpush1.msra.mxu0 %v318
    %346 = vmatprep.subr.mxu0 0.0
    %347 = vmatpush1.msra.mxu0 %v319
    %348 = vmatprep.subr.mxu0 0.0
    %349 = vmatpush1.msra.mxu0 %v320
    %350 = vmatprep.subr.mxu0 0.0
    %351 = vmatpush1.msra.mxu0 %v321
    %352 = vmatprep.subr.mxu0 0.0
    %353 = vmatpush1.msra.mxu0 %v322
    %354 = vmatprep.subr.mxu0 0.0
    %355 = vmatpush1.msra.mxu0 %v323
    %356 = vmatprep.subr.mxu0 0.0
    %357 = vmatpush1.msra.mxu0 %v324
    %358 = vmatprep.subr.mxu0 0.0
    %359 = vmatpush1.msra.mxu0 %v325
    %360 = vmatprep.subr.mxu0 0.0
    %361 = vmatpush1.msra.mxu0 %v326
    %362 = vmatprep.subr.mxu0 0.0
    %363 = vmatpush1.msra.mxu0 %v327
    %364 = vmatprep.subr.mxu0 0.0
    %365 = vmatpush1.msra.mxu0 %v328
    %366 = vmatprep.subr.mxu0 0.0
    %367 = vmatpush1.msra.mxu0 %v329
    %368 = vmatprep.subr.mxu0 0.0
    %369 = vmatpush1.msra.mxu0 %v330
    %370 = vmatprep.subr.mxu0 0.0
    %371 = vmatpush1.msra.mxu0 0.0
    %372 = vmatprep.subr.mxu0 0.0
    %373 = vmatpush1.msra.mxu0 0.0
    %374 = vmatprep.subr.mxu0 0.0
    %375 = vmatpush1.msra.mxu0 0.0
    %376 = vmatprep.subr.mxu0 0.0
    %377 = vmatpush1.msra.mxu0 0.0
    %378 = vmatprep.subr.mxu0 0.0
    %379 = vmatpush1.msra.mxu0 0.0
    %380 = vmatprep.subr.mxu0 0.0
    %381 = vmatpush1.msra.mxu0 0.0
    %382 = vmatprep.subr.mxu0 0.0
    %383 = vmatpush1.msra.mxu0 0.0
    %384 = vmatprep.subr.mxu0 0.0
    %385 = vmatpush1.msra.mxu0 0.0
    %386 = vmatprep.subr.mxu0 0.0
    %387 = vmatpush1.msra.mxu0 0.0
    %388 = vmatprep.subr.mxu0 0.0
    %389 = vmatpush1.msra.mxu0 0.0
    %390 = vmatprep.subr.mxu0 0.0
    %391 = vmatpush1.msra.mxu0 0.0
    %392 = vmatprep.subr.mxu0 0.0
    %393 = vmatpush1.msra.mxu0 0.0
    %394 = vmatprep.subr.mxu0 0.0
    %395 = vmatpush1.msra.mxu0 0.0
    %396 = vmatprep.subr.mxu0 0.0
    %397 = vmatpush1.msra.mxu0 0.0
    %398 = vmatprep.subr.mxu0 0.0
    %399 = vmatpush1.msra.mxu0 0.0
    %400 = vmatprep.subr.mxu0 0.0
    %401 = vmatpush1.msra.mxu0 0.0
    %402 = vmatprep.mubr.f32.mxu0 0.0
    %403 = vmatmul.mubr.f32.gmra.mrb[0].mxu0 %v307
    %v404 = vpop.f32.mrb[0].mxu0
    %v405 = vadd.f32 %v336, %v404
    %v406 = vpop.f32.mrb[0].mxu0
    %407 = vmatprep.mubr.f32.mxu0 0.0
    %408 = vmatmul.mubr.f32.gmra.mrb[0].mxu0 %v308
    %v409 = vpop.f32.mrb[0].mxu0
    %v410 = vadd.f32 %v336, %v409
    %v411 = vpop.f32.mrb[0].mxu0
    %412 = vmatprep.mubr.f32.mxu0 0.0
    %413 = vmatmul.mubr.f32.gmra.mrb[0].mxu0 %v309
    %v414 = vpop.f32.mrb[0].mxu0
    %v415 = vadd.f32 %v336, %v414
    %v416 = vpop.f32.mrb[0].mxu0
    %417 = vmatprep.mubr.f32.mxu0 0.0
    %418 = vmatmul.mubr.f32.gmra.mrb[0].mxu0 %v310
    %v419 = vpop.f32.mrb[0].mxu0
    %v420 = vadd.f32 %v336, %v419
    %v421 = vpop.f32.mrb[0].mxu0
    %422 = vmatprep.mubr.f32.mxu0 0.0
    %423 = vmatmul.mubr.f32.gmra.mrb[0].mxu0 %v311
    %v424 = vpop.f32.mrb[0].mxu0
    %v425 = vadd.f32 %v336, %v424
    %v426 = vpop.f32.mrb[0].mxu0
    %427 = vmatprep.mubr.f32.mxu0 0.0
    %428 = vmatmul.mubr.f32.gmra.mrb[0].mxu0 %v312
    %v429 = vpop.f32.mrb[0].mxu0
    %v430 = vadd.f32 %v336, %v429
    %v431 = vpop.f32.mrb[0].mxu0
    %432 = vmatprep.mubr.f32.mxu0 0.0
    %433 = vmatmul.mubr.f32.gmra.mrb[0].mxu0 %v313
    %v434 = vpop.f32.mrb[0].mxu0
    %v435 = vadd.f32 %v336, %v434
    %v436 = vpop.f32.mrb[0].mxu0
    %437 = vmatprep.mubr.f32.mxu0 0.0
    %438 = vmatmul.mubr.f32.gmra.mrb[0].mxu0 %v314
    %v439 = vpop.f32.mrb[0].mxu0
    %v440 = vadd.f32 %v336, %v439
    %v441 = vpop.f32.mrb[0].mxu0
    %442 = vdwg.mxu0
    %v443 = vtanh.pop %v405
    %v444 = vtanh.pop %v410
    %v445 = vtanh.pop %v415
    %v446 = vtanh.pop %v420
    %v447 = vtanh.pop %v425
    %v448 = vtanh.pop %v430
    %v449 = vtanh.pop %v435
    %v450 = vtanh.pop %v440
    %v451 = vld [vmem:[#allocation6] sm:$0xff]
    %v452 = vld [vmem:[#allocation6 + $0x8] sm:$0xff]
    %v453 = vld [vmem:[#allocation6 + $0x10] sm:$0xff]
    %v454 = vld [vmem:[#allocation6 + $0x18] sm:$0xff]
    %v455 = vld [vmem:[#allocation6 + $0x20] sm:$0xff]
    %v456 = vld [vmem:[#allocation6 + $0x28] sm:$0xff]
    %v457 = vld [vmem:[#allocation6 + $0x30] sm:$0xff]
    %v458 = vld [vmem:[#allocation6 + $0x38] sm:$0xff]
    %v459 = vld [vmem:[#allocation6 + $0x40] sm:$0xff]
    %v460 = vld [vmem:[#allocation6 + $0x48] sm:$0xff]
    %v461 = vld [vmem:[#allocation6 + $0x50] sm:$0xff]
    %v462 = vld [vmem:[#allocation6 + $0x58] sm:$0xff]
    %v463 = vld [vmem:[#allocation6 + $0x60] sm:$0xff]
    %v464 = vld [vmem:[#allocation6 + $0x68] sm:$0xff]
    %v465 = vld [vmem:[#allocation6 + $0x70] sm:$0xff]
    %v466 = vld [vmem:[#allocation6 + $0x78] sm:$0xff]
    %v467 = vld [vmem:[%s8] sm:$0x1]
    %v469 = vlaneseq
    %v470 = vshrl.u32 %v469, 7
    %v471 = vsub.s32 0, %v470
    %v472 = vrot.slane %v467, %v471
    %474 = vmatprep.subr.mxu0 0.0
    %475 = vmatpush1.msra.mxu0 %v451
    %476 = vmatprep.subr.mxu0 0.0
    %477 = vmatpush1.msra.mxu0 %v452
    %478 = vmatprep.subr.mxu0 0.0
    %479 = vmatpush1.msra.mxu0 %v453
    %480 = vmatprep.subr.mxu0 0.0
    %481 = vmatpush1.msra.mxu0 %v454
    %482 = vmatprep.subr.mxu0 0.0
    %483 = vmatpush1.msra.mxu0 %v455
    %484 = vmatprep.subr.mxu0 0.0
    %485 = vmatpush1.msra.mxu0 %v456
    %486 = vmatprep.subr.mxu0 0.0
    %487 = vmatpush1.msra.mxu0 %v457
    %488 = vmatprep.subr.mxu0 0.0
    %489 = vmatpush1.msra.mxu0 %v458
    %490 = vmatprep.subr.mxu0 0.0
    %491 = vmatpush1.msra.mxu0 %v459
    %492 = vmatprep.subr.mxu0 0.0
    %493 = vmatpush1.msra.mxu0 %v460
    %494 = vmatprep.subr.mxu0 0.0
    %495 = vmatpush1.msra.mxu0 %v461
    %496 = vmatprep.subr.mxu0 0.0
    %497 = vmatpush1.msra.mxu0 %v462
    %498 = vmatprep.subr.mxu0 0.0
    %499 = vmatpush1.msra.mxu0 %v463
    %500 = vmatprep.subr.mxu0 0.0
    %501 = vmatpush1.msra.mxu0 %v464
    %502 = vmatprep.subr.mxu0 0.0
    %503 = vmatpush1.msra.mxu0 %v465
    %504 = vmatprep.subr.mxu0 0.0
    %505 = vmatpush1.msra.mxu0 %v466
    %506 = vmatprep.subr.mxu0 0.0
    %507 = vmatpush1.msra.mxu0 0.0
    %508 = vmatprep.subr.mxu0 0.0
    %509 = vmatpush1.msra.mxu0 0.0
    %510 = vmatprep.subr.mxu0 0.0
    %511 = vmatpush1.msra.mxu0 0.0
    %512 = vmatprep.subr.mxu0 0.0
    %513 = vmatpush1.msra.mxu0 0.0
    %514 = vmatprep.subr.mxu0 0.0
    %515 = vmatpush1.msra.mxu0 0.0
    %516 = vmatprep.subr.mxu0 0.0
    %517 = vmatpush1.msra.mxu0 0.0
    %518 = vmatprep.subr.mxu0 0.0
    %519 = vmatpush1.msra.mxu0 0.0
    %520 = vmatprep.subr.mxu0 0.0
    %521 = vmatpush1.msra.mxu0 0.0
    %522 = vmatprep.subr.mxu0 0.0
    %523 = vmatpush1.msra.mxu0 0.0
    %524 = vmatprep.subr.mxu0 0.0
    %525 = vmatpush1.msra.mxu0 0.0
    %526 = vmatprep.subr.mxu0 0.0
    %527 = vmatpush1.msra.mxu0 0.0
    %528 = vmatprep.subr.mxu0 0.0
    %529 = vmatpush1.msra.mxu0 0.0
    %530 = vmatprep.subr.mxu0 0.0
    %531 = vmatpush1.msra.mxu0 0.0
    %532 = vmatprep.subr.mxu0 0.0
    %533 = vmatpush1.msra.mxu0 0.0
    %534 = vmatprep.subr.mxu0 0.0
    %535 = vmatpush1.msra.mxu0 0.0
    %536 = vmatprep.subr.mxu0 0.0
    %537 = vmatpush1.msra.mxu0 0.0
    %538 = vmatprep.mubr.f32.mxu0 0.0
    %539 = vmatmul.mubr.f32.gmra.mrb[0].mxu0 %v443
    %v540 = vpop.f32.mrb[0].mxu0
    %v541 = vadd.f32 %v472, %v540
    %v542 = vpop.f32.mrb[0].mxu0
    %543 = vmatprep.mubr.f32.mxu0 0.0
    %544 = vmatmul.mubr.f32.gmra.mrb[0].mxu0 %v444
    %v545 = vpop.f32.mrb[0].mxu0
    %v546 = vadd.f32 %v472, %v545
    %v547 = vpop.f32.mrb[0].mxu0
    %548 = vmatprep.mubr.f32.mxu0 0.0
    %549 = vmatmul.mubr.f32.gmra.mrb[0].mxu0 %v445
    %v550 = vpop.f32.mrb[0].mxu0
    %v551 = vadd.f32 %v472, %v550
    %v552 = vpop.f32.mrb[0].mxu0
    %553 = vmatprep.mubr.f32.mxu0 0.0
    %554 = vmatmul.mubr.f32.gmra.mrb[0].mxu0 %v446
    %v555 = vpop.f32.mrb[0].mxu0
    %v556 = vadd.f32 %v472, %v555
    %v557 = vpop.f32.mrb[0].mxu0
    %558 = vmatprep.mubr.f32.mxu0 0.0
    %559 = vmatmul.mubr.f32.gmra.mrb[0].mxu0 %v447
    %v560 = vpop.f32.mrb[0].mxu0
    %v561 = vadd.f32 %v472, %v560
    %v562 = vpop.f32.mrb[0].mxu0
    %563 = vmatprep.mubr.f32.mxu0 0.0
    %564 = vmatmul.mubr.f32.gmra.mrb[0].mxu0 %v448
    %v565 = vpop.f32.mrb[0].mxu0
    %v566 = vadd.f32 %v472, %v565
    %v567 = vpop.f32.mrb[0].mxu0
    %568 = vmatprep.mubr.f32.mxu0 0.0
    %569 = vmatmul.mubr.f32.gmra.mrb[0].mxu0 %v449
    %v570 = vpop.f32.mrb[0].mxu0
    %v571 = vadd.f32 %v472, %v570
    %v572 = vpop.f32.mrb[0].mxu0
    %573 = vmatprep.mubr.f32.mxu0 0.0
    %574 = vmatmul.mubr.f32.gmra.mrb[0].mxu0 %v450
    %v575 = vpop.f32.mrb[0].mxu0
    %v576 = vadd.f32 %v472, %v575
    %v577 = vpop.f32.mrb[0].mxu0
    %578 = vdwg.mxu0
    %v579 = vtanh.pop %v541
    %v580 = vtanh.pop %v546
    %v581 = vtanh.pop %v551
    %v582 = vtanh.pop %v556
    %v583 = vtanh.pop %v561
    %v584 = vtanh.pop %v566
    %v585 = vtanh.pop %v571
    %v586 = vtanh.pop %v576
    %v587 = vld [vmem:[#allocation7] sm:$0xff]
    %v588 = vld [vmem:[#allocation7 + $0x8] sm:$0xff]
    %v589 = vld [vmem:[#allocation7 + $0x10] sm:$0xff]
    %v590 = vld [vmem:[#allocation7 + $0x18] sm:$0xff]
    %v591 = vld [vmem:[#allocation7 + $0x20] sm:$0xff]
    %v592 = vld [vmem:[#allocation7 + $0x28] sm:$0xff]
    %v593 = vld [vmem:[#allocation7 + $0x30] sm:$0xff]
    %v594 = vld [vmem:[#allocation7 + $0x38] sm:$0xff]
    %v595 = vld [vmem:[#allocation7 + $0x40] sm:$0xff]
    %v596 = vld [vmem:[#allocation7 + $0x48] sm:$0xff]
    %v597 = vld [vmem:[#allocation7 + $0x50] sm:$0xff]
    %v598 = vld [vmem:[#allocation7 + $0x58] sm:$0xff]
    %v599 = vld [vmem:[#allocation7 + $0x60] sm:$0xff]
    %v600 = vld [vmem:[#allocation7 + $0x68] sm:$0xff]
    %v601 = vld [vmem:[#allocation7 + $0x70] sm:$0xff]
    %v602 = vld [vmem:[#allocation7 + $0x78] sm:$0xff]
    %v603 = vld [vmem:[%s10] sm:$0x1]
    %v605 = vlaneseq
    %v606 = vshrl.u32 %v605, 7
    %v607 = vsub.s32 0, %v606
    %v608 = vrot.slane %v603, %v607
    %610 = vmatprep.subr.mxu0 0.0
    %611 = vmatpush1.msra.mxu0 %v587
    %612 = vmatprep.subr.mxu0 0.0
    %613 = vmatpush1.msra.mxu0 %v588
    %614 = vmatprep.subr.mxu0 0.0
    %615 = vmatpush1.msra.mxu0 %v589
    %616 = vmatprep.subr.mxu0 0.0
    %617 = vmatpush1.msra.mxu0 %v590
    %618 = vmatprep.subr.mxu0 0.0
    %619 = vmatpush1.msra.mxu0 %v591
    %620 = vmatprep.subr.mxu0 0.0
    %621 = vmatpush1.msra.mxu0 %v592
    %622 = vmatprep.subr.mxu0 0.0
    %623 = vmatpush1.msra.mxu0 %v593
    %624 = vmatprep.subr.mxu0 0.0
    %625 = vmatpush1.msra.mxu0 %v594
    %626 = vmatprep.subr.mxu0 0.0
    %627 = vmatpush1.msra.mxu0 %v595
    %628 = vmatprep.subr.mxu0 0.0
    %629 = vmatpush1.msra.mxu0 %v596
    %630 = vmatprep.subr.mxu0 0.0
    %631 = vmatpush1.msra.mxu0 %v597
    %632 = vmatprep.subr.mxu0 0.0
    %633 = vmatpush1.msra.mxu0 %v598
    %634 = vmatprep.subr.mxu0 0.0
    %635 = vmatpush1.msra.mxu0 %v599
    %636 = vmatprep.subr.mxu0 0.0
    %637 = vmatpush1.msra.mxu0 %v600
    %638 = vmatprep.subr.mxu0 0.0
    %639 = vmatpush1.msra.mxu0 %v601
    %640 = vmatprep.subr.mxu0 0.0
    %641 = vmatpush1.msra.mxu0 %v602
    %642 = vmatprep.subr.mxu0 0.0
    %643 = vmatpush1.msra.mxu0 0.0
    %644 = vmatprep.subr.mxu0 0.0
    %645 = vmatpush1.msra.mxu0 0.0
    %646 = vmatprep.subr.mxu0 0.0
    %647 = vmatpush1.msra.mxu0 0.0
    %648 = vmatprep.subr.mxu0 0.0
    %649 = vmatpush1.msra.mxu0 0.0
    %650 = vmatprep.subr.mxu0 0.0
    %651 = vmatpush1.msra.mxu0 0.0
    %652 = vmatprep.subr.mxu0 0.0
    %653 = vmatpush1.msra.mxu0 0.0
    %654 = vmatprep.subr.mxu0 0.0
    %655 = vmatpush1.msra.mxu0 0.0
    %656 = vmatprep.subr.mxu0 0.0
    %657 = vmatpush1.msra.mxu0 0.0
    %658 = vmatprep.subr.mxu0 0.0
    %659 = vmatpush1.msra.mxu0 0.0
    %660 = vmatprep.subr.mxu0 0.0
    %661 = vmatpush1.msra.mxu0 0.0
    %662 = vmatprep.subr.mxu0 0.0
    %663 = vmatpush1.msra.mxu0 0.0
    %664 = vmatprep.subr.mxu0 0.0
    %665 = vmatpush1.msra.mxu0 0.0
    %666 = vmatprep.subr.mxu0 0.0
    %667 = vmatpush1.msra.mxu0 0.0
    %668 = vmatprep.subr.mxu0 0.0
    %669 = vmatpush1.msra.mxu0 0.0
    %670 = vmatprep.subr.mxu0 0.0
    %671 = vmatpush1.msra.mxu0 0.0
    %672 = vmatprep.subr.mxu0 0.0
    %673 = vmatpush1.msra.mxu0 0.0
    %674 = vmatprep.mubr.f32.mxu0 0.0
    %675 = vmatmul.mubr.f32.gmra.mrb[0].mxu0 %v579
    %v676 = vpop.f32.mrb[0].mxu0
    %v677 = vadd.f32 %v608, %v676
    %v678 = vpop.f32.mrb[0].mxu0
    %679 = vmatprep.mubr.f32.mxu0 0.0
    %680 = vmatmul.mubr.f32.gmra.mrb[0].mxu0 %v580
    %v681 = vpop.f32.mrb[0].mxu0
    %v682 = vadd.f32 %v608, %v681
    %v683 = vpop.f32.mrb[0].mxu0
    %684 = vmatprep.mubr.f32.mxu0 0.0
    %685 = vmatmul.mubr.f32.gmra.mrb[0].mxu0 %v581
    %v686 = vpop.f32.mrb[0].mxu0
    %v687 = vadd.f32 %v608, %v686
    %v688 = vpop.f32.mrb[0].mxu0
    %689 = vmatprep.mubr.f32.mxu0 0.0
    %690 = vmatmul.mubr.f32.gmra.mrb[0].mxu0 %v582
    %v691 = vpop.f32.mrb[0].mxu0
    %v692 = vadd.f32 %v608, %v691
    %v693 = vpop.f32.mrb[0].mxu0
    %694 = vmatprep.mubr.f32.mxu0 0.0
    %695 = vmatmul.mubr.f32.gmra.mrb[0].mxu0 %v583
    %v696 = vpop.f32.mrb[0].mxu0
    %v697 = vadd.f32 %v608, %v696
    %v698 = vpop.f32.mrb[0].mxu0
    %699 = vmatprep.mubr.f32.mxu0 0.0
    %700 = vmatmul.mubr.f32.gmra.mrb[0].mxu0 %v584
    %v701 = vpop.f32.mrb[0].mxu0
    %v702 = vadd.f32 %v608, %v701
    %v703 = vpop.f32.mrb[0].mxu0
    %704 = vmatprep.mubr.f32.mxu0 0.0
    %705 = vmatmul.mubr.f32.gmra.mrb[0].mxu0 %v585
    %v706 = vpop.f32.mrb[0].mxu0
    %v707 = vadd.f32 %v608, %v706
    %v708 = vpop.f32.mrb[0].mxu0
    %709 = vmatprep.mubr.f32.mxu0 0.0
    %710 = vmatmul.mubr.f32.gmra.mrb[0].mxu0 %v586
    %v711 = vpop.f32.mrb[0].mxu0
    %v712 = vadd.f32 %v608, %v711
    %v713 = vpop.f32.mrb[0].mxu0
    %714 = vdwg.mxu0
    %715 = vst [vmem:[%s11] sm:$0xff] %v677
    %716 = vst [vmem:[%s11 + $0x8] sm:$0xff] %v682
    %717 = vst [vmem:[%s11 + $0x10] sm:$0xff] %v687
    %718 = vst [vmem:[%s11 + $0x18] sm:$0xff] %v692
    %719 = vst [vmem:[%s11 + $0x20] sm:$0xff] %v697
    %720 = vst [vmem:[%s11 + $0x28] sm:$0xff] %v702
    %721 = vst [vmem:[%s11 + $0x30] sm:$0xff] %v707
    %722 = vst [vmem:[%s11 + $0x38] sm:$0xff] %v712
    // Predicated region
    $region62: #{glycemic_forward.1} parent=1 // pred_check
      _
    $region63: #{glycemic_forward.1} parent=1 // pred_check_branch
      %724 = sbr.rel (0) target = $region65
    $region64: #{glycemic_forward.1} parent=1 // pred_region
      _
    $region65: #{glycemic_forward.1} parent=1 // pred_fallthru
      _
    // Predicated region
    $region66: #{glycemic_forward.1} parent=1 // pred_check
      _
    $region67: #{glycemic_forward.1} parent=1 // pred_check_branch
      %726 = sbr.rel (0) target = $region69
    $region68: #{glycemic_forward.1} parent=1 // pred_region
      _
    $region69: #{glycemic_forward.1} parent=1 // pred_fallthru
      _
    %727 = vsyncpa [#allocation3], 1
    %728 = vsyncpa [#allocation5], 1
    %729 = vsyncpa [#allocation8], 1

</llo_original>
